<compile_context>
chip_gen: v6e
topology: v6e:2x2x1
jax: 0.10.0
libtpu: 0.0.40
codegen_flags: <defaults>
</compile_context>

<pallas_src>
import jax
import jax.numpy as jnp
from jax.experimental import pallas as pl
from jax.experimental.pallas import tpu as pltpu
import numpy as np


def _round_up(a, b):
    return (a + b - 1) // b * b


def gcn_kernel(adj_ref, xs_ref, dinv_ref, wt_ref, b_ref, out_ref, acc_ref):
    # adj_ref  : (TM, TK)        bf16  edge-count adjacency tile
    # xs_ref   : (TK, Cin_pad)   f32   D^{-1/2}-scaled node features
    # dinv_ref : (TM, 1)         f32   per-row deg^{-1/2}
    # wt_ref   : (Cin_pad, Cout_pad) f32  (W.T of nn.Linear, zero-padded)
    # b_ref    : (1, Cout_pad)   f32
    # out_ref  : (TM, Cout_pad)  f32
    # acc_ref  : (TM, Cin_pad)   f32   VMEM scratch accumulator
    k = pl.program_id(1)

    @pl.when(k == 0)
    def _init():
        acc_ref[...] = jnp.zeros_like(acc_ref)

    # acc += A_tile @ (D^{-1/2} x)_tile   (MXU, f32 accumulate)
    acc_ref[...] += jnp.dot(adj_ref[...].astype(jnp.float32), xs_ref[...],
                            preferred_element_type=jnp.float32)

    @pl.when(k == pl.num_programs(1) - 1)
    def _finalize():
        agg = dinv_ref[...] * acc_ref[...]            # left D^{-1/2} row-scale
        out_ref[...] = (jnp.dot(agg, wt_ref[...],
                                preferred_element_type=jnp.float32)
                        + b_ref[...])


def manual_gcn_layer(x, edge_index, weight, bias):
    """x: (N, Cin) f32, edge_index: (2, E) int32, weight: (Cout, Cin), bias: (Cout,)."""
    N, cin = x.shape
    cout = weight.shape[0]
    row, col = edge_index[0], edge_index[1]

    # ---- tile / padding choices -------------------------------------------
    TILE = 512                                    # MXU/roofline-friendly tile
    if N >= TILE:
        n_pad = _round_up(N, TILE)
        tm = tk = TILE
    else:
        n_pad = _round_up(N, 128)
        tm = tk = n_pad
    cin_pad = _round_up(max(cin, 1), 128)
    cout_pad = _round_up(max(cout, 1), 128)

    # ---- O(E) / O(N*C) preprocessing in plain JAX (the glue, not hot path) --
    # degree = bincount(row); dinv = deg**-0.5 with deg==0 -> 0 (exact f32 parity)
    deg = jnp.zeros((n_pad,), jnp.float32).at[row].add(1.0)
    dinv = jnp.where(deg > 0.0, deg ** -0.5, 0.0)                 # (n_pad,)
    dinv2d = dinv.reshape(n_pad, 1)

    # dense count adjacency (handles duplicate edges exactly like index_add_);
    # bf16 is exact for edge counts <= 256.
    adj = jnp.zeros((n_pad, n_pad), jnp.float32).at[row, col].add(1.0)
    adj = adj.astype(jnp.bfloat16)

    # pre-scale features by the right D^{-1/2} and zero-pad to lane-dense shapes
    xs = jnp.zeros((n_pad, cin_pad), jnp.float32)
    xs = xs.at[:N, :cin].set(dinv[:N, None] * x.astype(jnp.float32))

    wt = jnp.zeros((cin_pad, cout_pad), jnp.float32)
    wt = wt.at[:cin, :cout].set(weight.T.astype(jnp.float32))
    b2 = jnp.zeros((1, cout_pad), jnp.float32).at[0, :cout].set(
        bias.astype(jnp.float32))

    grid = (n_pad // tm, n_pad // tk)

    out_pad = pl.pallas_call(
        gcn_kernel,
        out_shape=jax.ShapeDtypeStruct((n_pad, cout_pad), jnp.float32),
        grid_spec=pltpu.PrefetchScalarGridSpec(
            num_scalar_prefetch=0,
            grid=grid,
            in_specs=[
                pl.BlockSpec((tm, tk), lambda i, k: (i, k)),        # adj
                pl.BlockSpec((tk, cin_pad), lambda i, k: (k, 0)),   # x_scaled
                pl.BlockSpec((tm, 1), lambda i, k: (i, 0)),         # dinv rows
                pl.BlockSpec((cin_pad, cout_pad), lambda i, k: (0, 0)),  # W.T
                pl.BlockSpec((1, cout_pad), lambda i, k: (0, 0)),   # bias
            ],
            out_specs=pl.BlockSpec((tm, cout_pad), lambda i, k: (i, 0)),
            scratch_shapes=[pltpu.VMEM((tm, cin_pad), jnp.float32)],
        ),
        compiler_params=pltpu.CompilerParams(
            dimension_semantics=("parallel", "arbitrary"),
            vmem_limit_bytes=32 * 1024 * 1024,
        ),
    )(adj, xs, dinv2d, wt, b2)

    return out_pad[:N, :cout]


def _reference(x, edge_index, weight, bias):
    """Pure-JAX replica of the PyTorch forward (edge-list form)."""
    row, col = edge_index[0], edge_index[1]
    N = x.shape[0]
    deg = jnp.zeros((N,), jnp.float32).at[row].add(1.0)
    dinv = jnp.where(deg > 0.0, deg ** -0.5, 0.0)
    norm = dinv[row] * dinv[col]
    agg = jnp.zeros_like(x).at[row].add(x[col] * norm[:, None])
    return agg @ weight.T + bias


if __name__ == "__main__":
    key = jax.random.PRNGKey(0)
    k_x, k_r, k_c, k_w, k_b = jax.random.split(key, 5)

    N, Cin, Cout, E = 16, 8, 32, 48

    x = jax.random.normal(k_x, (N, Cin), jnp.float32)
    row = jax.random.randint(k_r, (E,), 0, N, jnp.int32)
    col = jax.random.randint(k_c, (E,), 0, N, jnp.int32)
    edge_index = jnp.stack([row, col], axis=0)

    # Deterministic nn.Linear-style init: U(-1/sqrt(Cin), 1/sqrt(Cin))
    bound = 1.0 / np.sqrt(Cin)
    weight = jax.random.uniform(k_w, (Cout, Cin), jnp.float32, -bound, bound)
    bias = jax.random.uniform(k_b, (Cout,), jnp.float32, -bound, bound)

    out = manual_gcn_layer(x, edge_index, weight, bias)
    out = jax.block_until_ready(out)

    ref = _reference(x, edge_index, weight, bias)
    np.testing.assert_allclose(np.asarray(out), np.asarray(ref),
                               rtol=1e-5, atol=1e-5)

    print("KERNEL_OK")
</pallas_src>

<mosaic_0001>
module attributes {stable_mosaic.version = 11 : i64} {
  func.func @gcn_kernel(%arg0: i32, %arg1: i32, %arg2: memref<128x128xbf16, #tpu.memory_space<vmem>>, %arg3: memref<128x128xf32, #tpu.memory_space<vmem>>, %arg4: memref<128x1xf32, #tpu.memory_space<vmem>>, %arg5: memref<128x128xf32, #tpu.memory_space<vmem>>, %arg6: memref<1x128xf32, #tpu.memory_space<vmem>>, %arg7: memref<128x128xf32, #tpu.memory_space<vmem>>, %arg8: memref<128x128xf32, #tpu.memory_space<vmem>>) attributes {dimension_semantics = [#tpu.dimension_semantics<parallel>, #tpu.dimension_semantics<arbitrary>], iteration_bounds = array<i64: 1, 1>, scalar_prefetch = 0 : i64, scratch_operands = 1 : i64, tpu.core_type = #tpu.core_type<tc>, window_params = [{transform_indices = @transform_0, window_bounds = array<i64: 128, 128>}, {transform_indices = @transform_1, window_bounds = array<i64: 128, 128>}, {transform_indices = @transform_2, window_bounds = array<i64: 128, 1>}, {pipeline_mode = #tpu.pipeline_mode<synchronous>, transform_indices = @transform_3, window_bounds = array<i64: 128, 128>}, {pipeline_mode = #tpu.pipeline_mode<synchronous>, transform_indices = @transform_4, window_bounds = array<i64: 1, 128>}, {transform_indices = @transform_5, window_bounds = array<i64: 128, 128>}]} {
    %c0_i32 = arith.constant 0 : i32
    %0 = arith.cmpi eq, %arg1, %c0_i32 : i32
    %1 = arith.extui %0 : i1 to i32
    %c0_i32_0 = arith.constant 0 : i32
    %2 = arith.cmpi ne, %1, %c0_i32_0 : i32
    scf.if %2 {
      %cst_10 = arith.constant 0.000000e+00 : f32
      %13 = vector.broadcast %cst_10 : f32 to vector<128x128xf32>
      %c0_11 = arith.constant 0 : index
      %c0_12 = arith.constant 0 : index
      %14 = vector.load %arg8[%c0_11, %c0_12] : memref<128x128xf32, #tpu.memory_space<vmem>>, vector<128x128xf32>
      tpu.vector_store %arg8[%c0_11, %c0_12], %13 {strides = array<i32>} : memref<128x128xf32, #tpu.memory_space<vmem>>, vector<128x128xf32>,
    } else {
    }
    %c0 = arith.constant 0 : index
    %c0_1 = arith.constant 0 : index
    %3 = vector.load %arg8[%c0, %c0_1] : memref<128x128xf32, #tpu.memory_space<vmem>>, vector<128x128xf32>
    %c0_2 = arith.constant 0 : index
    %c0_3 = arith.constant 0 : index
    %4 = vector.load %arg2[%c0_2, %c0_3] : memref<128x128xbf16, #tpu.memory_space<vmem>>, vector<128x128xbf16>
    %5 = arith.extf %4 : vector<128x128xbf16> to vector<128x128xf32>
    %c0_4 = arith.constant 0 : index
    %c0_5 = arith.constant 0 : index
    %6 = vector.load %arg3[%c0_4, %c0_5] : memref<128x128xf32, #tpu.memory_space<vmem>>, vector<128x128xf32>
    %cst = arith.constant dense<0.000000e+00> : vector<128x128xf32>
    %7 = tpu.matmul %5, %6, %cst {dimension_numbers = #tpu.dot_dimension_numbers<[1], [0], [0], [1], [0, 0, 1, 1], [], []>} : vector<128x128xf32>, vector<128x128xf32>, vector<128x128xf32> -> vector<128x128xf32>
    %8 = arith.addf %3, %7 : vector<128x128xf32>
    %c0_6 = arith.constant 0 : index
    %c0_7 = arith.constant 0 : index
    %9 = vector.load %arg8[%c0_6, %c0_7] : memref<128x128xf32, #tpu.memory_space<vmem>>, vector<128x128xf32>
    tpu.vector_store %arg8[%c0_6, %c0_7], %8 {strides = array<i32>} : memref<128x128xf32, #tpu.memory_space<vmem>>, vector<128x128xf32>,
    %c0_i32_8 = arith.constant 0 : i32
    %10 = arith.cmpi eq, %arg1, %c0_i32_8 : i32
    %11 = arith.extui %10 : i1 to i32
    %c0_i32_9 = arith.constant 0 : i32
    %12 = arith.cmpi ne, %11, %c0_i32_9 : i32
    scf.if %12 {
      %c0_10 = arith.constant 0 : index
      %c0_11 = arith.constant 0 : index
      %13 = vector.load %arg4[%c0_10, %c0_11] : memref<128x1xf32, #tpu.memory_space<vmem>>, vector<128x1xf32>
      %c0_12 = arith.constant 0 : index
      %c0_13 = arith.constant 0 : index
      %14 = vector.load %arg8[%c0_12, %c0_13] : memref<128x128xf32, #tpu.memory_space<vmem>>, vector<128x128xf32>
      %15 = vector.broadcast %13 : vector<128x1xf32> to vector<128x128xf32>
      %16 = arith.mulf %15, %14 : vector<128x128xf32>
      %c0_14 = arith.constant 0 : index
      %c0_15 = arith.constant 0 : index
      %17 = vector.load %arg5[%c0_14, %c0_15] : memref<128x128xf32, #tpu.memory_space<vmem>>, vector<128x128xf32>
      %cst_16 = arith.constant dense<0.000000e+00> : vector<128x128xf32>
      %18 = tpu.matmul %16, %17, %cst_16 {dimension_numbers = #tpu.dot_dimension_numbers<[1], [0], [0], [1], [0, 0, 1, 1], [], []>} : vector<128x128xf32>, vector<128x128xf32>, vector<128x128xf32> -> vector<128x128xf32>
      %c0_17 = arith.constant 0 : index
      %c0_18 = arith.constant 0 : index
      %19 = vector.load %arg6[%c0_17, %c0_18] : memref<1x128xf32, #tpu.memory_space<vmem>>, vector<1x128xf32>
      %20 = vector.broadcast %19 : vector<1x128xf32> to vector<128x128xf32>
      %21 = arith.addf %18, %20 : vector<128x128xf32>
      %c0_19 = arith.constant 0 : index
      %c0_20 = arith.constant 0 : index
      %22 = vector.load %arg7[%c0_19, %c0_20] : memref<128x128xf32, #tpu.memory_space<vmem>>, vector<128x128xf32>
      tpu.vector_store %arg7[%c0_19, %c0_20], %21 {strides = array<i32>} : memref<128x128xf32, #tpu.memory_space<vmem>>, vector<128x128xf32>,
    } else {
    }
    return
  }
  func.func @transform_0(%arg0: i32, %arg1: i32) -> (i32, i32) {
    %c0_i32 = arith.constant 0 : i32
    return %arg0, %arg1 : i32, i32
  }
  func.func @transform_1(%arg0: i32, %arg1: i32) -> (i32, i32) {
    %c0_i32 = arith.constant 0 : i32
    %c0_i32_0 = arith.constant 0 : i32
    return %arg1, %c0_i32 : i32, i32
  }
  func.func @transform_2(%arg0: i32, %arg1: i32) -> (i32, i32) {
    %c0_i32 = arith.constant 0 : i32
    %c0_i32_0 = arith.constant 0 : i32
    return %arg0, %c0_i32 : i32, i32
  }
  func.func @transform_3(%arg0: i32, %arg1: i32) -> (i32, i32) {
    %c0_i32 = arith.constant 0 : i32
    %c0_i32_0 = arith.constant 0 : i32
    %c0_i32_1 = arith.constant 0 : i32
    return %c0_i32, %c0_i32_0 : i32, i32
  }
  func.func @transform_4(%arg0: i32, %arg1: i32) -> (i32, i32) {
    %c0_i32 = arith.constant 0 : i32
    %c0_i32_0 = arith.constant 0 : i32
    %c0_i32_1 = arith.constant 0 : i32
    return %c0_i32, %c0_i32_0 : i32, i32
  }
  func.func @transform_5(%arg0: i32, %arg1: i32) -> (i32, i32) {
    %c0_i32 = arith.constant 0 : i32
    %c0_i32_0 = arith.constant 0 : i32
    return %arg0, %c0_i32 : i32, i32
  }
}

</mosaic_0001>

<llo_original>
// kernel: tpu_custom_call.1
$region0: #{tpu_custom_call.1}
  #allocation0 [shape = 'u32[]', space=smem, size = 0x4, offset = 0x4, fixed_abs, tag = 'smem constant byte address 0x4 - core index']
  #allocation1 [shape = 'u32[144,128]{1,0:T(1,128)}', space=vmem, size = 0x12000, scoped, tag = 'internal scratch']
  #allocation2 [shape = 'f32[128,128]{1,0:T(8,128)}', space=vmem, size = 0x10000, scoped, tag = 'scratch operand']
  %s0 = inlined_call_operand.hbm [shape: bf16[128,128], index: 0, kind: input, shape index: {}]
  %s1 = inlined_call_operand.vmem [shape: f32[128,128], index: 1, kind: input, shape index: {}]
  %s2 = inlined_call_operand.vmem [shape: f32[128,1], index: 2, kind: input, shape index: {}]
  %s3 = inlined_call_operand.hbm [shape: f32[128,128], index: 3, kind: input, shape index: {}]
  %s4 = inlined_call_operand.vmem [shape: f32[1,128], index: 4, kind: input, shape index: {}]
  %s5 = inlined_call_operand.hbm [shape: f32[128,128], index: 5, kind: output, shape index: {}]
  %s6 = sld [smem:[#allocation0]]
  $region46: #{tpu_custom_call.1} parent=0
    _
  %s8 = ssub.s32 1, %s6
  %s9 = scalar_select 0, %s8, %s6
  $region1: #{tpu_custom_call.1} parent=0
    #allocation3 [shape = 'u8[32768]{0}', space=vmem, size = 0x8000, scoped, tag = 'input window, operand 0, single buffered']
    #allocation4 [shape = 's32[1]{0}', space=sflag, size = 0x4, scoped, tag = 'scoped memory for tpu_custom_call.1']
    #allocation5 [shape = 's32[1]{0}', space=sflag, size = 0x4, scoped, tag = 'scoped memory for tpu_custom_call.1']
    #allocation6 [shape = 'u8[65536]{0}', space=vmem, size = 0x10000, scoped, tag = 'input window, operand 3, single buffered']
    #allocation7 [shape = 's32[1]{0}', space=sflag, size = 0x4, scoped, tag = 'scoped memory for tpu_custom_call.1']
    #allocation8 [shape = 'u8[65536]{0}', space=vmem, size = 0x10000, scoped, tag = 'output window, operand 0, single buffered']
    %10 = vsyncpa [#allocation4], 0
    %11 = vsyncpa [#allocation7], 0
    %12 = vsyncpa [#allocation5], 0
    // Predicated region
    $region2: #{tpu_custom_call.1} parent=1 // pred_check
      _
    $region3: #{tpu_custom_call.1} parent=1 // pred_check_branch
      %14 = sbr.rel (0) target = $region5
    $region4: #{tpu_custom_call.1} parent=1 // pred_region
      %s16 = ssub.s32 1024, 1024
      %17 = vsyncadd [#allocation4], %s16
      %s18 = sshll.u32 [#allocation3], 4
      %s19 = int_to_ptr.vmem [resolvable:$true] %s18
      %24 = dma.hbm_to_vmem [thread:$0]  %s0, 1024, %s19, [#allocation4], 64, 64, 4
    $region5: #{tpu_custom_call.1} parent=1 // pred_fallthru
      _
    // Predicated region
    $region6: #{tpu_custom_call.1} parent=1 // pred_check
      _
    $region7: #{tpu_custom_call.1} parent=1 // pred_check_branch
      %26 = sbr.rel (0) target = $region9
    $region8: #{tpu_custom_call.1} parent=1 // pred_region
      _
    $region9: #{tpu_custom_call.1} parent=1 // pred_fallthru
      _
    // Predicated region
    $region10: #{tpu_custom_call.1} parent=1 // pred_check
      _
    $region11: #{tpu_custom_call.1} parent=1 // pred_check_branch
      %28 = sbr.rel (0) target = $region13
    $region12: #{tpu_custom_call.1} parent=1 // pred_region
      _
    $region13: #{tpu_custom_call.1} parent=1 // pred_fallthru
      _
    // Predicated region
    $region14: #{tpu_custom_call.1} parent=1 // pred_check
      _
    $region15: #{tpu_custom_call.1} parent=1 // pred_check_branch
      %30 = sbr.rel (0) target = $region17
    $region16: #{tpu_custom_call.1} parent=1 // pred_region
      %s32 = ssub.s32 2048, 2048
      %33 = vsyncadd [#allocation7], %s32
      %s34 = sshll.u32 [#allocation6], 4
      %s35 = int_to_ptr.vmem [resolvable:$true] %s34
      %40 = dma.hbm_to_vmem [thread:$0]  %s3, 2048, %s35, [#allocation7], 128, 128, 8
    $region17: #{tpu_custom_call.1} parent=1 // pred_fallthru
      _
    // Predicated region
    $region18: #{tpu_custom_call.1} parent=1 // pred_check
      _
    $region19: #{tpu_custom_call.1} parent=1 // pred_check_branch
      %42 = sbr.rel (0) target = $region21
    $region20: #{tpu_custom_call.1} parent=1 // pred_region
      _
    $region21: #{tpu_custom_call.1} parent=1 // pred_fallthru
      _
    // Predicated region
    $region22: #{tpu_custom_call.1} parent=1 // pred_check
      _
    $region23: #{tpu_custom_call.1} parent=1 // pred_check_branch
      %44 = sbr.rel (0) target = $region25
    $region24: #{tpu_custom_call.1} parent=1 // pred_region
      %45 = dma.done [#allocation4], 1024
    $region25: #{tpu_custom_call.1} parent=1 // pred_fallthru
      _
    // Predicated region
    $region26: #{tpu_custom_call.1} parent=1 // pred_check
      _
    $region27: #{tpu_custom_call.1} parent=1 // pred_check_branch
      %47 = sbr.rel (0) target = $region29
    $region28: #{tpu_custom_call.1} parent=1 // pred_region
      %48 = dma.done [#allocation7], 2048
    $region29: #{tpu_custom_call.1} parent=1 // pred_fallthru
      _
    %p49 = scmp.eq.s32.totalorder 0, 0
    // Predicated region
    $region30: #{tpu_custom_call.1} parent=1 // pred_check
      %p50 = pneg %p49
    $region31: #{tpu_custom_call.1} parent=1 // pred_check_branch
      %52 = sbr.rel (%p50) target = $region33
    $region32: #{tpu_custom_call.1} parent=1 // pred_region
      %53 = vst [vmem:[#allocation2] sm:$0xff] 0.0
      %54 = vst [vmem:[#allocation2 + $0x8] sm:$0xff] 0.0
      %55 = vst [vmem:[#allocation2 + $0x10] sm:$0xff] 0.0
      %56 = vst [vmem:[#allocation2 + $0x18] sm:$0xff] 0.0
      %57 = vst [vmem:[#allocation2 + $0x20] sm:$0xff] 0.0
      %58 = vst [vmem:[#allocation2 + $0x28] sm:$0xff] 0.0
      %59 = vst [vmem:[#allocation2 + $0x30] sm:$0xff] 0.0
      %60 = vst [vmem:[#allocation2 + $0x38] sm:$0xff] 0.0
      %61 = vst [vmem:[#allocation2 + $0x40] sm:$0xff] 0.0
      %62 = vst [vmem:[#allocation2 + $0x48] sm:$0xff] 0.0
      %63 = vst [vmem:[#allocation2 + $0x50] sm:$0xff] 0.0
      %64 = vst [vmem:[#allocation2 + $0x58] sm:$0xff] 0.0
      %65 = vst [vmem:[#allocation2 + $0x60] sm:$0xff] 0.0
      %66 = vst [vmem:[#allocation2 + $0x68] sm:$0xff] 0.0
      %67 = vst [vmem:[#allocation2 + $0x70] sm:$0xff] 0.0
      %68 = vst [vmem:[#allocation2 + $0x78] sm:$0xff] 0.0
    $region33: #{tpu_custom_call.1} parent=1 // pred_fallthru
      _
    %v69 = vld [vmem:[#allocation2] sm:$0xff]
    %v70 = vld [vmem:[#allocation2 + $0x8] sm:$0xff]
    %v71 = vld [vmem:[#allocation2 + $0x10] sm:$0xff]
    %v72 = vld [vmem:[#allocation2 + $0x18] sm:$0xff]
    %v73 = vld [vmem:[#allocation2 + $0x20] sm:$0xff]
    %v74 = vld [vmem:[#allocation2 + $0x28] sm:$0xff]
    %v75 = vld [vmem:[#allocation2 + $0x30] sm:$0xff]
    %v76 = vld [vmem:[#allocation2 + $0x38] sm:$0xff]
    %v77 = vld [vmem:[#allocation2 + $0x40] sm:$0xff]
    %v78 = vld [vmem:[#allocation2 + $0x48] sm:$0xff]
    %v79 = vld [vmem:[#allocation2 + $0x50] sm:$0xff]
    %v80 = vld [vmem:[#allocation2 + $0x58] sm:$0xff]
    %v81 = vld [vmem:[#allocation2 + $0x60] sm:$0xff]
    %v82 = vld [vmem:[#allocation2 + $0x68] sm:$0xff]
    %v83 = vld [vmem:[#allocation2 + $0x70] sm:$0xff]
    %v84 = vld [vmem:[#allocation2 + $0x78] sm:$0xff]
    %v85 = vld [vmem:[#allocation3] sm:$0xf]
    %v86 = vld [vmem:[#allocation3 + $0x4] sm:$0xf]
    %v87 = vld [vmem:[#allocation3 + $0x8] sm:$0xf]
    %v88 = vld [vmem:[#allocation3 + $0xc] sm:$0xf]
    %v89 = vld [vmem:[#allocation3 + $0x10] sm:$0xf]
    %v90 = vld [vmem:[#allocation3 + $0x14] sm:$0xf]
    %v91 = vld [vmem:[#allocation3 + $0x18] sm:$0xf]
    %v92 = vld [vmem:[#allocation3 + $0x1c] sm:$0xf]
    %v93 = vld [vmem:[#allocation3 + $0x20] sm:$0xf]
    %v94 = vld [vmem:[#allocation3 + $0x24] sm:$0xf]
    %v95 = vld [vmem:[#allocation3 + $0x28] sm:$0xf]
    %v96 = vld [vmem:[#allocation3 + $0x2c] sm:$0xf]
    %v97 = vld [vmem:[#allocation3 + $0x30] sm:$0xf]
    %v98 = vld [vmem:[#allocation3 + $0x34] sm:$0xf]
    %v99 = vld [vmem:[#allocation3 + $0x38] sm:$0xf]
    %v100 = vld [vmem:[#allocation3 + $0x3c] sm:$0xf]
    %v101 = vunpack.c.l.bf16 %v85
    %v102 = vunpack.c.l.bf16 %v86
    %v103 = vunpack.c.l.bf16 %v87
    %v104 = vunpack.c.l.bf16 %v88
    %v105 = vunpack.c.l.bf16 %v89
    %v106 = vunpack.c.l.bf16 %v90
    %v107 = vunpack.c.l.bf16 %v91
    %v108 = vunpack.c.l.bf16 %v92
    %v109 = vunpack.c.l.bf16 %v93
    %v110 = vunpack.c.l.bf16 %v94
    %v111 = vunpack.c.l.bf16 %v95
    %v112 = vunpack.c.l.bf16 %v96
    %v113 = vunpack.c.l.bf16 %v97
    %v114 = vunpack.c.l.bf16 %v98
    %v115 = vunpack.c.l.bf16 %v99
    %v116 = vunpack.c.l.bf16 %v100
    %v117 = vld [vmem:[%s1] sm:$0xff]
    %v118 = vld [vmem:[%s1 + $0x8] sm:$0xff]
    %v119 = vld [vmem:[%s1 + $0x10] sm:$0xff]
    %v120 = vld [vmem:[%s1 + $0x18] sm:$0xff]
    %v121 = vld [vmem:[%s1 + $0x20] sm:$0xff]
    %v122 = vld [vmem:[%s1 + $0x28] sm:$0xff]
    %v123 = vld [vmem:[%s1 + $0x30] sm:$0xff]
    %v124 = vld [vmem:[%s1 + $0x38] sm:$0xff]
    %v125 = vld [vmem:[%s1 + $0x40] sm:$0xff]
    %v126 = vld [vmem:[%s1 + $0x48] sm:$0xff]
    %v127 = vld [vmem:[%s1 + $0x50] sm:$0xff]
    %v128 = vld [vmem:[%s1 + $0x58] sm:$0xff]
    %v129 = vld [vmem:[%s1 + $0x60] sm:$0xff]
    %v130 = vld [vmem:[%s1 + $0x68] sm:$0xff]
    %v131 = vld [vmem:[%s1 + $0x70] sm:$0xff]
    %v132 = vld [vmem:[%s1 + $0x78] sm:$0xff]
    %133 = vmatprep.subr.mxu0 0.0
    %134 = vmatpush1.msra.mxu0 %v132
    %135 = vmatprep.subr.mxu0 0.0
    %136 = vmatpush1.msra.mxu0 %v131
    %137 = vmatprep.subr.mxu0 0.0
    %138 = vmatpush1.msra.mxu0 %v130
    %139 = vmatprep.subr.mxu0 0.0
    %140 = vmatpush1.msra.mxu0 %v129
    %141 = vmatprep.subr.mxu0 0.0
    %142 = vmatpush1.msra.mxu0 %v128
    %143 = vmatprep.subr.mxu0 0.0
    %144 = vmatpush1.msra.mxu0 %v127
    %145 = vmatprep.subr.mxu0 0.0
    %146 = vmatpush1.msra.mxu0 %v126
    %147 = vmatprep.subr.mxu0 0.0
    %148 = vmatpush1.msra.mxu0 %v125
    %149 = vmatprep.subr.mxu0 0.0
    %150 = vmatpush1.msra.mxu0 %v124
    %151 = vmatprep.subr.mxu0 0.0
    %152 = vmatpush1.msra.mxu0 %v123
    %153 = vmatprep.subr.mxu0 0.0
    %154 = vmatpush1.msra.mxu0 %v122
    %155 = vmatprep.subr.mxu0 0.0
    %156 = vmatpush1.msra.mxu0 %v121
    %157 = vmatprep.subr.mxu0 0.0
    %158 = vmatpush1.msra.mxu0 %v120
    %159 = vmatprep.subr.mxu0 0.0
    %160 = vmatpush1.msra.mxu0 %v119
    %161 = vmatprep.subr.mxu0 0.0
    %162 = vmatpush1.msra.mxu0 %v118
    %163 = vmatprep.subr.mxu0 0.0
    %164 = vmatpush1.msra.mxu0 %v117
    %165 = vmatprep.subr.mxu0 0.0
    %166 = vmatpush2.msra.mxu0 0.0
    %167 = vmatprep.subr.mxu0 0.0
    %168 = vmatpush2.msra.mxu0 0.0
    %169 = vmatprep.subr.mxu0 0.0
    %170 = vmatpush2.msra.mxu0 0.0
    %171 = vmatprep.subr.mxu0 0.0
    %172 = vmatpush2.msra.mxu0 0.0
    %173 = vmatprep.subr.mxu0 0.0
    %174 = vmatpush2.msra.mxu0 0.0
    %175 = vmatprep.subr.mxu0 0.0
    %176 = vmatpush2.msra.mxu0 0.0
    %177 = vmatprep.subr.mxu0 0.0
    %178 = vmatpush2.msra.mxu0 0.0
    %179 = vmatprep.subr.mxu0 0.0
    %180 = vmatpush2.msra.mxu0 0.0
    %181 = vmatprep.subr.mxu0 0.0
    %182 = vmatpush2.msra.mxu0 0.0
    %183 = vmatprep.subr.mxu0 0.0
    %184 = vmatpush2.msra.mxu0 0.0
    %185 = vmatprep.subr.mxu0 0.0
    %186 = vmatpush2.msra.mxu0 0.0
    %187 = vmatprep.subr.mxu0 0.0
    %188 = vmatpush2.msra.mxu0 0.0
    %189 = vmatprep.subr.mxu0 0.0
    %190 = vmatpush2.msra.mxu0 0.0
    %191 = vmatprep.subr.mxu0 0.0
    %192 = vmatpush2.msra.mxu0 0.0
    %193 = vmatprep.subr.mxu0 0.0
    %194 = vmatpush2.msra.mxu0 0.0
    %195 = vmatprep.subr.mxu0 0.0
    %196 = vmatpush2.msra.mxu0 0.0
    %197 = vmatprep.mubr.f32.mxu0 0.0
    %198 = vmatmul.mubr.f32.gmra.mxu0 %v101
    %v199 = vpop.f32.mrf.mxu0
    %v200 = vadd.f32 0.0, %v199
    %v201 = vpop.f32.mrf.mxu0
    %202 = vmatprep.mubr.f32.mxu0 0.0
    %203 = vmatmul.mubr.f32.gmra.mxu0 %v102
    %v204 = vpop.f32.mrf.mxu0
    %v205 = vadd.f32 0.0, %v204
    %v206 = vpop.f32.mrf.mxu0
    %207 = vmatprep.mubr.f32.mxu0 0.0
    %208 = vmatmul.mubr.f32.gmra.mxu0 %v103
    %v209 = vpop.f32.mrf.mxu0
    %v210 = vadd.f32 0.0, %v209
    %v211 = vpop.f32.mrf.mxu0
    %212 = vmatprep.mubr.f32.mxu0 0.0
    %213 = vmatmul.mubr.f32.gmra.mxu0 %v104
    %v214 = vpop.f32.mrf.mxu0
    %v215 = vadd.f32 0.0, %v214
    %v216 = vpop.f32.mrf.mxu0
    %217 = vmatprep.mubr.f32.mxu0 0.0
    %218 = vmatmul.mubr.f32.gmra.mxu0 %v105
    %v219 = vpop.f32.mrf.mxu0
    %v220 = vadd.f32 0.0, %v219
    %v221 = vpop.f32.mrf.mxu0
    %222 = vmatprep.mubr.f32.mxu0 0.0
    %223 = vmatmul.mubr.f32.gmra.mxu0 %v106
    %v224 = vpop.f32.mrf.mxu0
    %v225 = vadd.f32 0.0, %v224
    %v226 = vpop.f32.mrf.mxu0
    %227 = vmatprep.mubr.f32.mxu0 0.0
    %228 = vmatmul.mubr.f32.gmra.mxu0 %v107
    %v229 = vpop.f32.mrf.mxu0
    %v230 = vadd.f32 0.0, %v229
    %v231 = vpop.f32.mrf.mxu0
    %232 = vmatprep.mubr.f32.mxu0 0.0
    %233 = vmatmul.mubr.f32.gmra.mxu0 %v108
    %v234 = vpop.f32.mrf.mxu0
    %v235 = vadd.f32 0.0, %v234
    %v236 = vpop.f32.mrf.mxu0
    %237 = vmatprep.mubr.f32.mxu0 0.0
    %238 = vmatmul.mubr.f32.gmra.mxu0 %v109
    %v239 = vpop.f32.mrf.mxu0
    %v240 = vadd.f32 0.0, %v239
    %v241 = vpop.f32.mrf.mxu0
    %242 = vmatprep.mubr.f32.mxu0 0.0
    %243 = vmatmul.mubr.f32.gmra.mxu0 %v110
    %v244 = vpop.f32.mrf.mxu0
    %v245 = vadd.f32 0.0, %v244
    %v246 = vpop.f32.mrf.mxu0
    %247 = vmatprep.mubr.f32.mxu0 0.0
    %248 = vmatmul.mubr.f32.gmra.mxu0 %v111
    %v249 = vpop.f32.mrf.mxu0
    %v250 = vadd.f32 0.0, %v249
    %v251 = vpop.f32.mrf.mxu0
    %252 = vmatprep.mubr.f32.mxu0 0.0
    %253 = vmatmul.mubr.f32.gmra.mxu0 %v112
    %v254 = vpop.f32.mrf.mxu0
    %v255 = vadd.f32 0.0, %v254
    %v256 = vpop.f32.mrf.mxu0
    %257 = vmatprep.mubr.f32.mxu0 0.0
    %258 = vmatmul.mubr.f32.gmra.mxu0 %v113
    %v259 = vpop.f32.mrf.mxu0
    %v260 = vadd.f32 0.0, %v259
    %v261 = vpop.f32.mrf.mxu0
    %262 = vmatprep.mubr.f32.mxu0 0.0
    %263 = vmatmul.mubr.f32.gmra.mxu0 %v114
    %v264 = vpop.f32.mrf.mxu0
    %v265 = vadd.f32 0.0, %v264
    %v266 = vpop.f32.mrf.mxu0
    %267 = vmatprep.mubr.f32.mxu0 0.0
    %268 = vmatmul.mubr.f32.gmra.mxu0 %v115
    %v269 = vpop.f32.mrf.mxu0
    %v270 = vadd.f32 0.0, %v269
    %v271 = vpop.f32.mrf.mxu0
    %272 = vmatprep.mubr.f32.mxu0 0.0
    %273 = vmatmul.mubr.f32.gmra.mxu0 %v116
    %v274 = vpop.f32.mrf.mxu0
    %v275 = vadd.f32 0.0, %v274
    %v276 = vpop.f32.mrf.mxu0
    %277 = vdwg.mxu0
    %v278 = vadd.f32 %v69, %v200
    %v279 = vadd.f32 %v70, %v205
    %v280 = vadd.f32 %v71, %v210
    %v281 = vadd.f32 %v72, %v215
    %v282 = vadd.f32 %v73, %v220
    %v283 = vadd.f32 %v74, %v225
    %v284 = vadd.f32 %v75, %v230
    %v285 = vadd.f32 %v76, %v235
    %v286 = vadd.f32 %v77, %v240
    %v287 = vadd.f32 %v78, %v245
    %v288 = vadd.f32 %v79, %v250
    %v289 = vadd.f32 %v80, %v255
    %v290 = vadd.f32 %v81, %v260
    %v291 = vadd.f32 %v82, %v265
    %v292 = vadd.f32 %v83, %v270
    %v293 = vadd.f32 %v84, %v275
    %294 = vst [vmem:[#allocation2] sm:$0xff] %v278
    %295 = vst [vmem:[#allocation2 + $0x8] sm:$0xff] %v279
    %296 = vst [vmem:[#allocation2 + $0x10] sm:$0xff] %v280
    %297 = vst [vmem:[#allocation2 + $0x18] sm:$0xff] %v281
    %298 = vst [vmem:[#allocation2 + $0x20] sm:$0xff] %v282
    %299 = vst [vmem:[#allocation2 + $0x28] sm:$0xff] %v283
    %300 = vst [vmem:[#allocation2 + $0x30] sm:$0xff] %v284
    %301 = vst [vmem:[#allocation2 + $0x38] sm:$0xff] %v285
    %302 = vst [vmem:[#allocation2 + $0x40] sm:$0xff] %v286
    %303 = vst [vmem:[#allocation2 + $0x48] sm:$0xff] %v287
    %304 = vst [vmem:[#allocation2 + $0x50] sm:$0xff] %v288
    %305 = vst [vmem:[#allocation2 + $0x58] sm:$0xff] %v289
    %306 = vst [vmem:[#allocation2 + $0x60] sm:$0xff] %v290
    %307 = vst [vmem:[#allocation2 + $0x68] sm:$0xff] %v291
    %308 = vst [vmem:[#allocation2 + $0x70] sm:$0xff] %v292
    %309 = vst [vmem:[#allocation2 + $0x78] sm:$0xff] %v293
    // Predicated region
    $region34: #{tpu_custom_call.1} parent=1 // pred_check
      %p310 = pneg %p49
    $region35: #{tpu_custom_call.1} parent=1 // pred_check_branch
      %312 = sbr.rel (%p310) target = $region37
    $region36: #{tpu_custom_call.1} parent=1 // pred_region
      %v313 = vld [vmem:[%s2] sm:$0xff]
      %v314 = vld [vmem:[%s2 + $0x8] sm:$0xff]
      %v315 = vld [vmem:[%s2 + $0x10] sm:$0xff]
      %v316 = vld [vmem:[%s2 + $0x18] sm:$0xff]
      %v317 = vld [vmem:[%s2 + $0x20] sm:$0xff]
      %v318 = vld [vmem:[%s2 + $0x28] sm:$0xff]
      %v319 = vld [vmem:[%s2 + $0x30] sm:$0xff]
      %v320 = vld [vmem:[%s2 + $0x38] sm:$0xff]
      %v321 = vld [vmem:[%s2 + $0x40] sm:$0xff]
      %v322 = vld [vmem:[%s2 + $0x48] sm:$0xff]
      %v323 = vld [vmem:[%s2 + $0x50] sm:$0xff]
      %v324 = vld [vmem:[%s2 + $0x58] sm:$0xff]
      %v325 = vld [vmem:[%s2 + $0x60] sm:$0xff]
      %v326 = vld [vmem:[%s2 + $0x68] sm:$0xff]
      %v327 = vld [vmem:[%s2 + $0x70] sm:$0xff]
      %v328 = vld [vmem:[%s2 + $0x78] sm:$0xff]
      %v329 = vld [vmem:[#allocation2] sm:$0xff]
      %v330 = vld [vmem:[#allocation2 + $0x8] sm:$0xff]
      %v331 = vld [vmem:[#allocation2 + $0x10] sm:$0xff]
      %v332 = vld [vmem:[#allocation2 + $0x18] sm:$0xff]
      %v333 = vld [vmem:[#allocation2 + $0x20] sm:$0xff]
      %v334 = vld [vmem:[#allocation2 + $0x28] sm:$0xff]
      %v335 = vld [vmem:[#allocation2 + $0x30] sm:$0xff]
      %v336 = vld [vmem:[#allocation2 + $0x38] sm:$0xff]
      %v337 = vld [vmem:[#allocation2 + $0x40] sm:$0xff]
      %v338 = vld [vmem:[#allocation2 + $0x48] sm:$0xff]
      %v339 = vld [vmem:[#allocation2 + $0x50] sm:$0xff]
      %v340 = vld [vmem:[#allocation2 + $0x58] sm:$0xff]
      %v341 = vld [vmem:[#allocation2 + $0x60] sm:$0xff]
      %v342 = vld [vmem:[#allocation2 + $0x68] sm:$0xff]
      %v343 = vld [vmem:[#allocation2 + $0x70] sm:$0xff]
      %v344 = vld [vmem:[#allocation2 + $0x78] sm:$0xff]
      %346 = vset.pattern.permute.xlu0 0
      %347 = vperm.xlu0 %346, %v313
      %v348 = vpop.permute.xlu0 %347
      %351 = vset.pattern.permute.xlu0 0
      %352 = vperm.xlu0 %351, %v314
      %v353 = vpop.permute.xlu0 %352
      %356 = vset.pattern.permute.xlu0 0
      %357 = vperm.xlu0 %356, %v315
      %v358 = vpop.permute.xlu0 %357
      %361 = vset.pattern.permute.xlu0 0
      %362 = vperm.xlu0 %361, %v316
      %v363 = vpop.permute.xlu0 %362
      %366 = vset.pattern.permute.xlu0 0
      %367 = vperm.xlu0 %366, %v317
      %v368 = vpop.permute.xlu0 %367
      %371 = vset.pattern.permute.xlu0 0
      %372 = vperm.xlu0 %371, %v318
      %v373 = vpop.permute.xlu0 %372
      %376 = vset.pattern.permute.xlu0 0
      %377 = vperm.xlu0 %376, %v319
      %v378 = vpop.permute.xlu0 %377
      %381 = vset.pattern.permute.xlu0 0
      %382 = vperm.xlu0 %381, %v320
      %v383 = vpop.permute.xlu0 %382
      %386 = vset.pattern.permute.xlu0 0
      %387 = vperm.xlu0 %386, %v321
      %v388 = vpop.permute.xlu0 %387
      %391 = vset.pattern.permute.xlu0 0
      %392 = vperm.xlu0 %391, %v322
      %v393 = vpop.permute.xlu0 %392
      %396 = vset.pattern.permute.xlu0 0
      %397 = vperm.xlu0 %396, %v323
      %v398 = vpop.permute.xlu0 %397
      %401 = vset.pattern.permute.xlu0 0
      %402 = vperm.xlu0 %401, %v324
      %v403 = vpop.permute.xlu0 %402
      %406 = vset.pattern.permute.xlu0 0
      %407 = vperm.xlu0 %406, %v325
      %v408 = vpop.permute.xlu0 %407
      %411 = vset.pattern.permute.xlu0 0
      %412 = vperm.xlu0 %411, %v326
      %v413 = vpop.permute.xlu0 %412
      %416 = vset.pattern.permute.xlu0 0
      %417 = vperm.xlu0 %416, %v327
      %v418 = vpop.permute.xlu0 %417
      %421 = vset.pattern.permute.xlu0 0
      %422 = vperm.xlu0 %421, %v328
      %v423 = vpop.permute.xlu0 %422
      %v425 = vmul.f32 %v348, %v329
      %v426 = vmul.f32 %v353, %v330
      %v427 = vmul.f32 %v358, %v331
      %v428 = vmul.f32 %v363, %v332
      %v429 = vmul.f32 %v368, %v333
      %v430 = vmul.f32 %v373, %v334
      %v431 = vmul.f32 %v378, %v335
      %v432 = vmul.f32 %v383, %v336
      %v433 = vmul.f32 %v388, %v337
      %v434 = vmul.f32 %v393, %v338
      %v435 = vmul.f32 %v398, %v339
      %v436 = vmul.f32 %v403, %v340
      %v437 = vmul.f32 %v408, %v341
      %v438 = vmul.f32 %v413, %v342
      %v439 = vmul.f32 %v418, %v343
      %v440 = vmul.f32 %v423, %v344
      %v441 = vld [vmem:[#allocation6] sm:$0xff]
      %v442 = vld [vmem:[#allocation6 + $0x8] sm:$0xff]
      %v443 = vld [vmem:[#allocation6 + $0x10] sm:$0xff]
      %v444 = vld [vmem:[#allocation6 + $0x18] sm:$0xff]
      %v445 = vld [vmem:[#allocation6 + $0x20] sm:$0xff]
      %v446 = vld [vmem:[#allocation6 + $0x28] sm:$0xff]
      %v447 = vld [vmem:[#allocation6 + $0x30] sm:$0xff]
      %v448 = vld [vmem:[#allocation6 + $0x38] sm:$0xff]
      %v449 = vld [vmem:[#allocation6 + $0x40] sm:$0xff]
      %v450 = vld [vmem:[#allocation6 + $0x48] sm:$0xff]
      %v451 = vld [vmem:[#allocation6 + $0x50] sm:$0xff]
      %v452 = vld [vmem:[#allocation6 + $0x58] sm:$0xff]
      %v453 = vld [vmem:[#allocation6 + $0x60] sm:$0xff]
      %v454 = vld [vmem:[#allocation6 + $0x68] sm:$0xff]
      %v455 = vld [vmem:[#allocation6 + $0x70] sm:$0xff]
      %v456 = vld [vmem:[#allocation6 + $0x78] sm:$0xff]
      %v457 = vld [vmem:[%s4] sm:$0x1]
      %v459 = vlaneseq
      %v460 = vshrl.u32 %v459, 7
      %v461 = vsub.s32 0, %v460
      %v462 = vrot.slane %v457, %v461
      %464 = vmatprep.subr.mxu0 0.0
      %465 = vmatpush1.msra.mxu0 %v456
      %466 = vmatprep.subr.mxu0 0.0
      %467 = vmatpush1.msra.mxu0 %v455
      %468 = vmatprep.subr.mxu0 0.0
      %469 = vmatpush1.msra.mxu0 %v454
      %470 = vmatprep.subr.mxu0 0.0
      %471 = vmatpush1.msra.mxu0 %v453
      %472 = vmatprep.subr.mxu0 0.0
      %473 = vmatpush1.msra.mxu0 %v452
      %474 = vmatprep.subr.mxu0 0.0
      %475 = vmatpush1.msra.mxu0 %v451
      %476 = vmatprep.subr.mxu0 0.0
      %477 = vmatpush1.msra.mxu0 %v450
      %478 = vmatprep.subr.mxu0 0.0
      %479 = vmatpush1.msra.mxu0 %v449
      %480 = vmatprep.subr.mxu0 0.0
      %481 = vmatpush1.msra.mxu0 %v448
      %482 = vmatprep.subr.mxu0 0.0
      %483 = vmatpush1.msra.mxu0 %v447
      %484 = vmatprep.subr.mxu0 0.0
      %485 = vmatpush1.msra.mxu0 %v446
      %486 = vmatprep.subr.mxu0 0.0
      %487 = vmatpush1.msra.mxu0 %v445
      %488 = vmatprep.subr.mxu0 0.0
      %489 = vmatpush1.msra.mxu0 %v444
      %490 = vmatprep.subr.mxu0 0.0
      %491 = vmatpush1.msra.mxu0 %v443
      %492 = vmatprep.subr.mxu0 0.0
      %493 = vmatpush1.msra.mxu0 %v442
      %494 = vmatprep.subr.mxu0 0.0
      %495 = vmatpush1.msra.mxu0 %v441
      %496 = vmatprep.subr.mxu0 0.0
      %497 = vmatpush2.msra.mxu0 0.0
      %498 = vmatprep.subr.mxu0 0.0
      %499 = vmatpush2.msra.mxu0 0.0
      %500 = vmatprep.subr.mxu0 0.0
      %501 = vmatpush2.msra.mxu0 0.0
      %502 = vmatprep.subr.mxu0 0.0
      %503 = vmatpush2.msra.mxu0 0.0
      %504 = vmatprep.subr.mxu0 0.0
      %505 = vmatpush2.msra.mxu0 0.0
      %506 = vmatprep.subr.mxu0 0.0
      %507 = vmatpush2.msra.mxu0 0.0
      %508 = vmatprep.subr.mxu0 0.0
      %509 = vmatpush2.msra.mxu0 0.0
      %510 = vmatprep.subr.mxu0 0.0
      %511 = vmatpush2.msra.mxu0 0.0
      %512 = vmatprep.subr.mxu0 0.0
      %513 = vmatpush2.msra.mxu0 0.0
      %514 = vmatprep.subr.mxu0 0.0
      %515 = vmatpush2.msra.mxu0 0.0
      %516 = vmatprep.subr.mxu0 0.0
      %517 = vmatpush2.msra.mxu0 0.0
      %518 = vmatprep.subr.mxu0 0.0
      %519 = vmatpush2.msra.mxu0 0.0
      %520 = vmatprep.subr.mxu0 0.0
      %521 = vmatpush2.msra.mxu0 0.0
      %522 = vmatprep.subr.mxu0 0.0
      %523 = vmatpush2.msra.mxu0 0.0
      %524 = vmatprep.subr.mxu0 0.0
      %525 = vmatpush2.msra.mxu0 0.0
      %526 = vmatprep.subr.mxu0 0.0
      %527 = vmatpush2.msra.mxu0 0.0
      %528 = vmatprep.mubr.f32.mxu0 0.0
      %529 = vmatmul.mubr.f32.gmra.mxu0 %v425
      %v530 = vpop.f32.mrf.mxu0
      %v531 = vadd.f32 %v462, %v530
      %v532 = vpop.f32.mrf.mxu0
      %533 = vmatprep.mubr.f32.mxu0 0.0
      %534 = vmatmul.mubr.f32.gmra.mxu0 %v426
      %v535 = vpop.f32.mrf.mxu0
      %v536 = vadd.f32 %v462, %v535
      %v537 = vpop.f32.mrf.mxu0
      %538 = vmatprep.mubr.f32.mxu0 0.0
      %539 = vmatmul.mubr.f32.gmra.mxu0 %v427
      %v540 = vpop.f32.mrf.mxu0
      %v541 = vadd.f32 %v462, %v540
      %v542 = vpop.f32.mrf.mxu0
      %543 = vmatprep.mubr.f32.mxu0 0.0
      %544 = vmatmul.mubr.f32.gmra.mxu0 %v428
      %v545 = vpop.f32.mrf.mxu0
      %v546 = vadd.f32 %v462, %v545
      %v547 = vpop.f32.mrf.mxu0
      %548 = vmatprep.mubr.f32.mxu0 0.0
      %549 = vmatmul.mubr.f32.gmra.mxu0 %v429
      %v550 = vpop.f32.mrf.mxu0
      %v551 = vadd.f32 %v462, %v550
      %v552 = vpop.f32.mrf.mxu0
      %553 = vmatprep.mubr.f32.mxu0 0.0
      %554 = vmatmul.mubr.f32.gmra.mxu0 %v430
      %v555 = vpop.f32.mrf.mxu0
      %v556 = vadd.f32 %v462, %v555
      %v557 = vpop.f32.mrf.mxu0
      %558 = vmatprep.mubr.f32.mxu0 0.0
      %559 = vmatmul.mubr.f32.gmra.mxu0 %v431
      %v560 = vpop.f32.mrf.mxu0
      %v561 = vadd.f32 %v462, %v560
      %v562 = vpop.f32.mrf.mxu0
      %563 = vmatprep.mubr.f32.mxu0 0.0
      %564 = vmatmul.mubr.f32.gmra.mxu0 %v432
      %v565 = vpop.f32.mrf.mxu0
      %v566 = vadd.f32 %v462, %v565
      %v567 = vpop.f32.mrf.mxu0
      %568 = vmatprep.mubr.f32.mxu0 0.0
      %569 = vmatmul.mubr.f32.gmra.mxu0 %v433
      %v570 = vpop.f32.mrf.mxu0
      %v571 = vadd.f32 %v462, %v570
      %v572 = vpop.f32.mrf.mxu0
      %573 = vmatprep.mubr.f32.mxu0 0.0
      %574 = vmatmul.mubr.f32.gmra.mxu0 %v434
      %v575 = vpop.f32.mrf.mxu0
      %v576 = vadd.f32 %v462, %v575
      %v577 = vpop.f32.mrf.mxu0
      %578 = vmatprep.mubr.f32.mxu0 0.0
      %579 = vmatmul.mubr.f32.gmra.mxu0 %v435
      %v580 = vpop.f32.mrf.mxu0
      %v581 = vadd.f32 %v462, %v580
      %v582 = vpop.f32.mrf.mxu0
      %583 = vmatprep.mubr.f32.mxu0 0.0
      %584 = vmatmul.mubr.f32.gmra.mxu0 %v436
      %v585 = vpop.f32.mrf.mxu0
      %v586 = vadd.f32 %v462, %v585
      %v587 = vpop.f32.mrf.mxu0
      %588 = vmatprep.mubr.f32.mxu0 0.0
      %589 = vmatmul.mubr.f32.gmra.mxu0 %v437
      %v590 = vpop.f32.mrf.mxu0
      %v591 = vadd.f32 %v462, %v590
      %v592 = vpop.f32.mrf.mxu0
      %593 = vmatprep.mubr.f32.mxu0 0.0
      %594 = vmatmul.mubr.f32.gmra.mxu0 %v438
      %v595 = vpop.f32.mrf.mxu0
      %v596 = vadd.f32 %v462, %v595
      %v597 = vpop.f32.mrf.mxu0
      %598 = vmatprep.mubr.f32.mxu0 0.0
      %599 = vmatmul.mubr.f32.gmra.mxu0 %v439
      %v600 = vpop.f32.mrf.mxu0
      %v601 = vadd.f32 %v462, %v600
      %v602 = vpop.f32.mrf.mxu0
      %603 = vmatprep.mubr.f32.mxu0 0.0
      %604 = vmatmul.mubr.f32.gmra.mxu0 %v440
      %v605 = vpop.f32.mrf.mxu0
      %v606 = vadd.f32 %v462, %v605
      %v607 = vpop.f32.mrf.mxu0
      %608 = vdwg.mxu0
      %609 = vst [vmem:[#allocation8] sm:$0xff] %v531
      %610 = vst [vmem:[#allocation8 + $0x8] sm:$0xff] %v536
      %611 = vst [vmem:[#allocation8 + $0x10] sm:$0xff] %v541
      %612 = vst [vmem:[#allocation8 + $0x18] sm:$0xff] %v546
      %613 = vst [vmem:[#allocation8 + $0x20] sm:$0xff] %v551
      %614 = vst [vmem:[#allocation8 + $0x28] sm:$0xff] %v556
      %615 = vst [vmem:[#allocation8 + $0x30] sm:$0xff] %v561
      %616 = vst [vmem:[#allocation8 + $0x38] sm:$0xff] %v566
      %617 = vst [vmem:[#allocation8 + $0x40] sm:$0xff] %v571
      %618 = vst [vmem:[#allocation8 + $0x48] sm:$0xff] %v576
      %619 = vst [vmem:[#allocation8 + $0x50] sm:$0xff] %v581
      %620 = vst [vmem:[#allocation8 + $0x58] sm:$0xff] %v586
      %621 = vst [vmem:[#allocation8 + $0x60] sm:$0xff] %v591
      %622 = vst [vmem:[#allocation8 + $0x68] sm:$0xff] %v596
      %623 = vst [vmem:[#allocation8 + $0x70] sm:$0xff] %v601
      %624 = vst [vmem:[#allocation8 + $0x78] sm:$0xff] %v606
    $region37: #{tpu_custom_call.1} parent=1 // pred_fallthru
      _
    // Predicated region
    $region38: #{tpu_custom_call.1} parent=1 // pred_check
      _
    $region39: #{tpu_custom_call.1} parent=1 // pred_check_branch
      %626 = sbr.rel (0) target = $region41
    $region40: #{tpu_custom_call.1} parent=1 // pred_region
      %s628 = ssub.s32 2048, 2048
      %629 = vsyncadd [#allocation5], %s628
      %s630 = sshll.u32 [#allocation8], 4
      %s631 = int_to_ptr.vmem [resolvable:$true] %s630
      %636 = dma.vmem_to_hbm [thread:$0]  %s631, 2048, %s5, [#allocation5], 128, 128, 8
    $region41: #{tpu_custom_call.1} parent=1 // pred_fallthru
      _
    // Predicated region
    $region42: #{tpu_custom_call.1} parent=1 // pred_check
      _
    $region43: #{tpu_custom_call.1} parent=1 // pred_check_branch
      %638 = sbr.rel (0) target = $region45
    $region44: #{tpu_custom_call.1} parent=1 // pred_region
      %639 = dma.done [#allocation5], 2048
    $region45: #{tpu_custom_call.1} parent=1 // pred_fallthru
      _
    %640 = vsyncpa [#allocation4], 1
    %641 = vsyncpa [#allocation7], 1
    %642 = vsyncpa [#allocation5], 1

</llo_original>
